<compile_context>
chip_gen: v7x
topology: tpu7x:2x2x1
jax: 0.10.0
libtpu: 0.0.40
codegen_flags: <defaults>
</compile_context>

<pallas_src>
import itertools

import numpy as np
import jax
import jax.numpy as jnp
from jax.experimental import pallas as pl
from jax.experimental.pallas import tpu as pltpu

_LANES = 128
_SUBLANES = 8


# ---------------------------------------------------------------------------
# Kernel 1: batched weighted cdist (p=2), one grid step per batch element.
#   cost[b, i, j] = || f_w * pred[b, i] - f_w * target[b, j] ||_2
# ---------------------------------------------------------------------------
def _cdist_direct_kernel(pred_ref, tgt_ref, fw_ref, out_ref):
    # Small-N/M path: direct diff-square on the VPU (MXU would be <4%
    # utilized; also avoids the x^2 + y^2 - 2xy cancellation).
    x = pred_ref[0] * fw_ref[0]                  # (N, D)
    y = tgt_ref[0] * fw_ref[0]                   # (M, D)
    diff = x[:, None, :] - y[None, :, :]         # (N, M, D)
    d2 = jnp.sum(diff * diff, axis=-1)           # (N, M)
    out_ref[0] = jnp.sqrt(d2)


def _cdist_mxu_kernel(pred_ref, tgt_ref, fw_ref, out_ref):
    # Large-N/M path: MXU matmul formulation.
    x = pred_ref[0] * fw_ref[0]                  # (N, D)
    y = tgt_ref[0] * fw_ref[0]                   # (M, D)
    x2 = jnp.sum(x * x, axis=-1, keepdims=True)  # (N, 1)
    y2 = jnp.sum(y * y, axis=-1)[None, :]        # (1, M)
    xy = jax.lax.dot_general(x, y, (((1,), (1,)), ((), ())),
                             preferred_element_type=jnp.float32)
    d2 = jnp.maximum(x2 + y2 - 2.0 * xy, 0.0)
    out_ref[0] = jnp.sqrt(d2)


def batched_cdist(pred, tgt, fw):
    """cost[b, i, j] = ||fw*pred[b,i] - fw*tgt[b,j]||_2  ->  (B, N, M) f32."""
    B, N, D = pred.shape
    M = tgt.shape[1]
    fw3 = jnp.broadcast_to(fw.reshape(1, 1, -1), (1, 1, D)).astype(jnp.float32)

    small = (N <= 32) and (M <= 32)
    kernel = _cdist_direct_kernel if small else _cdist_mxu_kernel
    # TODO(synk): for very large N/M, also tile the N axis (256-multiples on
    # v6e/v7x, 128-multiples on v5e) instead of one (N, M) block per batch.
    return pl.pallas_call(
        kernel,
        out_shape=jax.ShapeDtypeStruct((B, N, M), jnp.float32),
        grid=(B,),
        in_specs=[
            pl.BlockSpec((1, N, D), lambda b: (b, 0, 0)),
            pl.BlockSpec((1, M, D), lambda b: (b, 0, 0)),
            pl.BlockSpec((1, 1, D), lambda b: (0, 0, 0)),
        ],
        out_specs=pl.BlockSpec((1, N, M), lambda b: (b, 0, 0)),
        compiler_params=pltpu.CompilerParams(
            dimension_semantics=("parallel",)),
    )(pred.astype(jnp.float32), tgt.astype(jnp.float32), fw3)


# ---------------------------------------------------------------------------
# Kernel 2: streaming MSE (mean of squared differences) over a lane-dense
# (rows, 128) stream.  (8, 128) VMEM vector accumulator; per-step work is pure
# VPU adds; one cross-lane reduce + SMEM scalar write in the finalize.
# ---------------------------------------------------------------------------
def _make_sse_kernel(inv_count):
    def kernel(p_ref, t_ref, out_ref, acc_ref):
        step = pl.program_id(0)

        @pl.when(step == 0)
        def _init():
            acc_ref[...] = jnp.zeros_like(acc_ref)

        d = p_ref[...] - t_ref[...]
        sq = d * d
        # Fold the tile rows onto the (8, 128) accumulator slab: VPU adds only.
        acc_ref[...] += jnp.sum(sq.reshape(-1, _SUBLANES, _LANES), axis=0)

        @pl.when(step == pl.num_programs(0) - 1)
        def _finalize():
            out_ref[0, 0] = jnp.sum(acc_ref[...]) * inv_count

    return kernel


def streaming_mse(pred, tgt, *, max_tile_rows=2048):
    """mean((pred - tgt)^2) over all elements via a Pallas streaming kernel."""
    assert pred.shape == tgt.shape
    n = int(np.prod(pred.shape))
    p = pred.reshape(-1).astype(jnp.float32)
    t = tgt.reshape(-1).astype(jnp.float32)

    rows = pl.cdiv(n, _LANES)
    rows = _SUBLANES * pl.cdiv(rows, _SUBLANES)          # multiple of 8
    tile_rows = min(max_tile_rows, rows)                 # <= 1 MiB per block
    n_tiles = pl.cdiv(rows, tile_rows)
    rows = tile_rows * n_tiles
    n_pad = rows * _LANES
    if n_pad != n:
        # Zero-pad BOTH streams: padded elements contribute 0 to the sum; the
        # divisor uses the true element count.
        p = jnp.pad(p, (0, n_pad - n))
        t = jnp.pad(t, (0, n_pad - n))
    p = p.reshape(rows, _LANES)
    t = t.reshape(rows, _LANES)

    out = pl.pallas_call(
        _make_sse_kernel(1.0 / float(n)),
        out_shape=jax.ShapeDtypeStruct((1, 1), jnp.float32),
        grid=(n_tiles,),
        in_specs=[
            pl.BlockSpec((tile_rows, _LANES), lambda i: (i, 0)),
            pl.BlockSpec((tile_rows, _LANES), lambda i: (i, 0)),
        ],
        out_specs=pl.BlockSpec(memory_space=pltpu.MemorySpace.SMEM),
        scratch_shapes=[pltpu.VMEM((_SUBLANES, _LANES), jnp.float32)],
        # Reduction axis -> 'arbitrary'.
        # TODO(synk): on v7x, emit per-block partial sums under a 'parallel'
        # axis so both TensorCores stream half the data; single-pass is
        # optimal on v5e/v6e (1 TC).
        compiler_params=pltpu.CompilerParams(
            dimension_semantics=("arbitrary",)),
    )(p, t)
    return out[0, 0]


# ---------------------------------------------------------------------------
# On-device assignment: exhaustive search over the constant N! permutation
# table (exact optimum, same result as Hungarian for small N).
# ---------------------------------------------------------------------------
def _permutation_table(n):
    # TODO(synk): exact Hungarian (scipy linear_sum_assignment) is a
    # sequential, data-dependent algorithm with no clean Pallas equivalent;
    # for the small N this module targets we use an exhaustive on-device
    # search.  Guarded because the table is O(N!).
    if n > 9:
        raise NotImplementedError("brute-force assignment limited to N <= 9")
    return np.asarray(list(itertools.permutations(range(n))), dtype=np.int32)


# ---------------------------------------------------------------------------
# HungarianLoss.forward (mode=SeqMat, base_loss='mse'), fully on device.
# ---------------------------------------------------------------------------
@jax.jit
def hungarian_loss_seqmat(pred_nodes, target_nodes, pred_adj, target_adj, f_w):
    B, N, D = pred_nodes.shape

    # Hot path 1: batched weighted cost matrix (Pallas, parallel over batch).
    cost = batched_cdist(pred_nodes, target_nodes, f_w)               # (B, N, N)

    # Assignment: gather cost along the constant permutation table, sum,
    # argmin — no device->host->device round trip.
    perms = jnp.asarray(_permutation_table(N))                        # (P, N)
    row_ids = jnp.arange(N, dtype=jnp.int32)
    perm_costs = jnp.sum(cost[:, row_ids[None, :], perms], axis=-1)   # (B, P)
    best = jnp.argmin(perm_costs, axis=-1)                            # (B,)
    col_idx = perms[best]                                             # (B, N)
    # row_ind from linear_sum_assignment on a square matrix is arange(N), so
    # the pred-side gathers are the identity and are skipped.

    tgt_nm = jnp.take_along_axis(target_nodes, col_idx[:, :, None], axis=1)
    tgt_am = jnp.take_along_axis(
        jnp.take_along_axis(target_adj, col_idx[:, :, None], axis=1),
        col_idx[:, None, :], axis=2)

    # Hot path 2: lane-dense streaming MSE reductions (Pallas).
    # Per-batch MSE then batch-mean == global mean (equal element counts).
    node_loss = streaming_mse(pred_nodes, tgt_nm)
    edge_loss = streaming_mse(pred_adj, tgt_am)
    return node_loss, edge_loss


if __name__ == "__main__":
    B, N, D = 2, 8, 32

    key = jax.random.PRNGKey(0)
    k1, k2, k3, k4 = jax.random.split(key, 4)
    pred_nodes = jax.random.normal(k1, (B, N, D), dtype=jnp.float32)
    target_nodes = jax.random.normal(k2, (B, N, D), dtype=jnp.float32)
    pred_adj = jax.random.normal(k3, (B, N, N), dtype=jnp.float32)
    target_adj = jax.random.normal(k4, (B, N, N), dtype=jnp.float32)

    # Deterministic "parameter": feature weights (torch: view(1, 1, -1)).
    feature_weight = [1.0 + 0.05 * i for i in range(D)]
    f_w = jnp.asarray(feature_weight, dtype=jnp.float32).reshape(1, 1, D)

    node_loss, edge_loss = hungarian_loss_seqmat(
        pred_nodes, target_nodes, pred_adj, target_adj, f_w
    )
    node_loss = jax.block_until_ready(node_loss)
    edge_loss = jax.block_until_ready(edge_loss)
    print("node_loss:", float(node_loss), "edge_loss:", float(edge_loss))
    print("KERNEL_OK")
</pallas_src>

<mosaic_0001>
module attributes {stable_mosaic.version = 11 : i64} {
  func.func @_cdist_direct_kernel(%arg0: i32, %arg1: memref<1x8x32xf32, #tpu.memory_space<vmem>>, %arg2: memref<1x8x32xf32, #tpu.memory_space<vmem>>, %arg3: memref<1x1x32xf32, #tpu.memory_space<vmem>>, %arg4: memref<1x8x8xf32, #tpu.memory_space<vmem>>) attributes {dimension_semantics = [#tpu.dimension_semantics<parallel>], iteration_bounds = array<i64: 2>, scalar_prefetch = 0 : i64, scratch_operands = 0 : i64, tpu.core_type = #tpu.core_type<tc>, window_params = [{transform_indices = @transform_0, window_bounds = array<i64: 1, 8, 32>}, {transform_indices = @transform_1, window_bounds = array<i64: 1, 8, 32>}, {pipeline_mode = #tpu.pipeline_mode<synchronous>, transform_indices = @transform_2, window_bounds = array<i64: 1, 1, 32>}, {transform_indices = @transform_3, window_bounds = array<i64: 1, 8, 8>}]} {
    %c0 = arith.constant 0 : index
    %c0_0 = arith.constant 0 : index
    %c0_1 = arith.constant 0 : index
    %0 = vector.load %arg1[%c0, %c0_0, %c0_1] : memref<1x8x32xf32, #tpu.memory_space<vmem>>, vector<1x8x32xf32>
    %1 = vector.shape_cast %0 : vector<1x8x32xf32> to vector<8x32xf32>
    %c0_2 = arith.constant 0 : index
    %c0_3 = arith.constant 0 : index
    %c0_4 = arith.constant 0 : index
    %2 = vector.load %arg3[%c0_2, %c0_3, %c0_4] : memref<1x1x32xf32, #tpu.memory_space<vmem>>, vector<1x1x32xf32>
    %3 = vector.shape_cast %2 : vector<1x1x32xf32> to vector<1x32xf32>
    %4 = vector.broadcast %3 : vector<1x32xf32> to vector<8x32xf32>
    %5 = arith.mulf %1, %4 : vector<8x32xf32>
    %c0_5 = arith.constant 0 : index
    %c0_6 = arith.constant 0 : index
    %c0_7 = arith.constant 0 : index
    %6 = vector.load %arg2[%c0_5, %c0_6, %c0_7] : memref<1x8x32xf32, #tpu.memory_space<vmem>>, vector<1x8x32xf32>
    %7 = vector.shape_cast %6 : vector<1x8x32xf32> to vector<8x32xf32>
    %c0_8 = arith.constant 0 : index
    %c0_9 = arith.constant 0 : index
    %c0_10 = arith.constant 0 : index
    %8 = vector.load %arg3[%c0_8, %c0_9, %c0_10] : memref<1x1x32xf32, #tpu.memory_space<vmem>>, vector<1x1x32xf32>
    %9 = vector.shape_cast %8 : vector<1x1x32xf32> to vector<1x32xf32>
    %10 = vector.broadcast %9 : vector<1x32xf32> to vector<8x32xf32>
    %11 = arith.mulf %7, %10 : vector<8x32xf32>
    %12 = vector.shape_cast %5 : vector<8x32xf32> to vector<8x1x32xf32>
    %13 = vector.shape_cast %11 : vector<8x32xf32> to vector<1x8x32xf32>
    %14 = vector.broadcast %12 : vector<8x1x32xf32> to vector<8x8x32xf32>
    %15 = vector.broadcast %13 : vector<1x8x32xf32> to vector<8x8x32xf32>
    %16 = arith.subf %14, %15 : vector<8x8x32xf32>
    %17 = arith.mulf %16, %16 : vector<8x8x32xf32>
    %cst = arith.constant dense<0.000000e+00> : vector<8x8xf32>
    %18 = vector.multi_reduction <add>, %17, %cst [2] : vector<8x8x32xf32> to vector<8x8xf32>
    %19 = math.sqrt %18 : vector<8x8xf32>
    %c0_11 = arith.constant 0 : index
    %c0_12 = arith.constant 0 : index
    %c0_13 = arith.constant 0 : index
    %20 = vector.load %arg4[%c0_11, %c0_12, %c0_13] : memref<1x8x8xf32, #tpu.memory_space<vmem>>, vector<1x8x8xf32>
    %21 = vector.shape_cast %20 : vector<1x8x8xf32> to vector<8x8xf32>
    %22 = vector.shape_cast %19 : vector<8x8xf32> to vector<1x8x8xf32>
    tpu.vector_store %arg4[%c0_11, %c0_12, %c0_13], %22 {strides = array<i32>} : memref<1x8x8xf32, #tpu.memory_space<vmem>>, vector<1x8x8xf32>,
    return
  }
  func.func @transform_0(%arg0: i32) -> (i32, i32, i32) {
    %c0_i32 = arith.constant 0 : i32
    %c0_i32_0 = arith.constant 0 : i32
    %c0_i32_1 = arith.constant 0 : i32
    return %arg0, %c0_i32, %c0_i32_0 : i32, i32, i32
  }
  func.func @transform_1(%arg0: i32) -> (i32, i32, i32) {
    %c0_i32 = arith.constant 0 : i32
    %c0_i32_0 = arith.constant 0 : i32
    %c0_i32_1 = arith.constant 0 : i32
    return %arg0, %c0_i32, %c0_i32_0 : i32, i32, i32
  }
  func.func @transform_2(%arg0: i32) -> (i32, i32, i32) {
    %c0_i32 = arith.constant 0 : i32
    %c0_i32_0 = arith.constant 0 : i32
    %c0_i32_1 = arith.constant 0 : i32
    %c0_i32_2 = arith.constant 0 : i32
    return %c0_i32, %c0_i32_0, %c0_i32_1 : i32, i32, i32
  }
  func.func @transform_3(%arg0: i32) -> (i32, i32, i32) {
    %c0_i32 = arith.constant 0 : i32
    %c0_i32_0 = arith.constant 0 : i32
    %c0_i32_1 = arith.constant 0 : i32
    return %arg0, %c0_i32, %c0_i32_0 : i32, i32, i32
  }
}

module attributes {stable_mosaic.version = 11 : i64} {
  func.func @kernel(%arg0: i32, %arg1: memref<8x128xf32, #tpu.memory_space<vmem>>, %arg2: memref<8x128xf32, #tpu.memory_space<vmem>>, %arg3: memref<1x1xf32, #tpu.memory_space<smem>>, %arg4: memref<8x128xf32, #tpu.memory_space<vmem>>) attributes {dimension_semantics = [#tpu.dimension_semantics<arbitrary>], iteration_bounds = array<i64: 1>, scalar_prefetch = 0 : i64, scratch_operands = 1 : i64, tpu.core_type = #tpu.core_type<tc>, window_params = [{transform_indices = @transform_0, window_bounds = array<i64: 8, 128>}, {transform_indices = @transform_1, window_bounds = array<i64: 8, 128>}, {transform_indices = @transform_2, window_bounds = array<i64: 1, 1>}]} {
    %c0_i32 = arith.constant 0 : i32
    %0 = arith.cmpi eq, %arg0, %c0_i32 : i32
    %1 = arith.extui %0 : i1 to i32
    %c0_i32_0 = arith.constant 0 : i32
    %2 = arith.cmpi ne, %1, %c0_i32_0 : i32
    scf.if %2 {
      %cst_10 = arith.constant 0.000000e+00 : f32
      %15 = vector.broadcast %cst_10 : f32 to vector<8x128xf32>
      %c0_11 = arith.constant 0 : index
      %c0_12 = arith.constant 0 : index
      %16 = vector.load %arg4[%c0_11, %c0_12] : memref<8x128xf32, #tpu.memory_space<vmem>>, vector<8x128xf32>
      tpu.vector_store %arg4[%c0_11, %c0_12], %15 {strides = array<i32>} : memref<8x128xf32, #tpu.memory_space<vmem>>, vector<8x128xf32>,
    } else {
    }
    %c0 = arith.constant 0 : index
    %c0_1 = arith.constant 0 : index
    %3 = vector.load %arg1[%c0, %c0_1] : memref<8x128xf32, #tpu.memory_space<vmem>>, vector<8x128xf32>
    %c0_2 = arith.constant 0 : index
    %c0_3 = arith.constant 0 : index
    %4 = vector.load %arg2[%c0_2, %c0_3] : memref<8x128xf32, #tpu.memory_space<vmem>>, vector<8x128xf32>
    %5 = arith.subf %3, %4 : vector<8x128xf32>
    %6 = arith.mulf %5, %5 : vector<8x128xf32>
    %c0_4 = arith.constant 0 : index
    %c0_5 = arith.constant 0 : index
    %7 = vector.load %arg4[%c0_4, %c0_5] : memref<8x128xf32, #tpu.memory_space<vmem>>, vector<8x128xf32>
    %8 = vector.shape_cast %6 : vector<8x128xf32> to vector<1x8x128xf32>
    %cst = arith.constant dense<0.000000e+00> : vector<8x128xf32>
    %9 = vector.multi_reduction <add>, %8, %cst [0] : vector<1x8x128xf32> to vector<8x128xf32>
    %10 = arith.addf %7, %9 : vector<8x128xf32>
    %c0_6 = arith.constant 0 : index
    %c0_7 = arith.constant 0 : index
    %11 = vector.load %arg4[%c0_6, %c0_7] : memref<8x128xf32, #tpu.memory_space<vmem>>, vector<8x128xf32>
    tpu.vector_store %arg4[%c0_6, %c0_7], %10 {strides = array<i32>} : memref<8x128xf32, #tpu.memory_space<vmem>>, vector<8x128xf32>,
    %c0_i32_8 = arith.constant 0 : i32
    %12 = arith.cmpi eq, %arg0, %c0_i32_8 : i32
    %13 = arith.extui %12 : i1 to i32
    %c0_i32_9 = arith.constant 0 : i32
    %14 = arith.cmpi ne, %13, %c0_i32_9 : i32
    scf.if %14 {
      %c0_10 = arith.constant 0 : index
      %c0_11 = arith.constant 0 : index
      %15 = vector.load %arg4[%c0_10, %c0_11] : memref<8x128xf32, #tpu.memory_space<vmem>>, vector<8x128xf32>
      %16 = vector.shape_cast %15 : vector<8x128xf32> to vector<1x8x128xf32>
      %cst_12 = arith.constant dense<0.000000e+00> : vector<1xf32>
      %17 = vector.multi_reduction <add>, %16, %cst_12 [1, 2] : vector<1x8x128xf32> to vector<1xf32>
      %18 = vector.shape_cast %17 : vector<1xf32> to vector<1x1x1xf32>
      %19 = vector.extract %18[0, 0, 0] : f32 from vector<1x1x1xf32>
      %cst_13 = arith.constant 7.812500e-03 : f32
      %20 = arith.mulf %19, %cst_13 : f32
      %c0_14 = arith.constant 0 : index
      %c0_15 = arith.constant 0 : index
      %21 = memref.load %arg3[%c0_14, %c0_15] : memref<1x1xf32, #tpu.memory_space<smem>>
      memref.store %20, %arg3[%c0_14, %c0_15] : memref<1x1xf32, #tpu.memory_space<smem>>
    } else {
    }
    return
  }
  func.func @transform_0(%arg0: i32) -> (i32, i32) {
    %c0_i32 = arith.constant 0 : i32
    %c0_i32_0 = arith.constant 0 : i32
    return %arg0, %c0_i32 : i32, i32
  }
  func.func @transform_1(%arg0: i32) -> (i32, i32) {
    %c0_i32 = arith.constant 0 : i32
    %c0_i32_0 = arith.constant 0 : i32
    return %arg0, %c0_i32 : i32, i32
  }
  func.func @transform_2(%arg0: i32) -> (i32, i32) {
    %c0_i32 = arith.constant 0 : i32
    %c0_i32_0 = arith.constant 0 : i32
    %c0_i32_1 = arith.constant 0 : i32
    return %c0_i32, %c0_i32_0 : i32, i32
  }
}

module attributes {stable_mosaic.version = 11 : i64} {
  func.func @kernel(%arg0: i32, %arg1: memref<8x128xf32, #tpu.memory_space<vmem>>, %arg2: memref<8x128xf32, #tpu.memory_space<vmem>>, %arg3: memref<1x1xf32, #tpu.memory_space<smem>>, %arg4: memref<8x128xf32, #tpu.memory_space<vmem>>) attributes {dimension_semantics = [#tpu.dimension_semantics<arbitrary>], iteration_bounds = array<i64: 1>, scalar_prefetch = 0 : i64, scratch_operands = 1 : i64, tpu.core_type = #tpu.core_type<tc>, window_params = [{transform_indices = @transform_0, window_bounds = array<i64: 8, 128>}, {transform_indices = @transform_1, window_bounds = array<i64: 8, 128>}, {transform_indices = @transform_2, window_bounds = array<i64: 1, 1>}]} {
    %c0_i32 = arith.constant 0 : i32
    %0 = arith.cmpi eq, %arg0, %c0_i32 : i32
    %1 = arith.extui %0 : i1 to i32
    %c0_i32_0 = arith.constant 0 : i32
    %2 = arith.cmpi ne, %1, %c0_i32_0 : i32
    scf.if %2 {
      %cst_10 = arith.constant 0.000000e+00 : f32
      %15 = vector.broadcast %cst_10 : f32 to vector<8x128xf32>
      %c0_11 = arith.constant 0 : index
      %c0_12 = arith.constant 0 : index
      %16 = vector.load %arg4[%c0_11, %c0_12] : memref<8x128xf32, #tpu.memory_space<vmem>>, vector<8x128xf32>
      tpu.vector_store %arg4[%c0_11, %c0_12], %15 {strides = array<i32>} : memref<8x128xf32, #tpu.memory_space<vmem>>, vector<8x128xf32>,
    } else {
    }
    %c0 = arith.constant 0 : index
    %c0_1 = arith.constant 0 : index
    %3 = vector.load %arg1[%c0, %c0_1] : memref<8x128xf32, #tpu.memory_space<vmem>>, vector<8x128xf32>
    %c0_2 = arith.constant 0 : index
    %c0_3 = arith.constant 0 : index
    %4 = vector.load %arg2[%c0_2, %c0_3] : memref<8x128xf32, #tpu.memory_space<vmem>>, vector<8x128xf32>
    %5 = arith.subf %3, %4 : vector<8x128xf32>
    %6 = arith.mulf %5, %5 : vector<8x128xf32>
    %c0_4 = arith.constant 0 : index
    %c0_5 = arith.constant 0 : index
    %7 = vector.load %arg4[%c0_4, %c0_5] : memref<8x128xf32, #tpu.memory_space<vmem>>, vector<8x128xf32>
    %8 = vector.shape_cast %6 : vector<8x128xf32> to vector<1x8x128xf32>
    %cst = arith.constant dense<0.000000e+00> : vector<8x128xf32>
    %9 = vector.multi_reduction <add>, %8, %cst [0] : vector<1x8x128xf32> to vector<8x128xf32>
    %10 = arith.addf %7, %9 : vector<8x128xf32>
    %c0_6 = arith.constant 0 : index
    %c0_7 = arith.constant 0 : index
    %11 = vector.load %arg4[%c0_6, %c0_7] : memref<8x128xf32, #tpu.memory_space<vmem>>, vector<8x128xf32>
    tpu.vector_store %arg4[%c0_6, %c0_7], %10 {strides = array<i32>} : memref<8x128xf32, #tpu.memory_space<vmem>>, vector<8x128xf32>,
    %c0_i32_8 = arith.constant 0 : i32
    %12 = arith.cmpi eq, %arg0, %c0_i32_8 : i32
    %13 = arith.extui %12 : i1 to i32
    %c0_i32_9 = arith.constant 0 : i32
    %14 = arith.cmpi ne, %13, %c0_i32_9 : i32
    scf.if %14 {
      %c0_10 = arith.constant 0 : index
      %c0_11 = arith.constant 0 : index
      %15 = vector.load %arg4[%c0_10, %c0_11] : memref<8x128xf32, #tpu.memory_space<vmem>>, vector<8x128xf32>
      %16 = vector.shape_cast %15 : vector<8x128xf32> to vector<1x8x128xf32>
      %cst_12 = arith.constant dense<0.000000e+00> : vector<1xf32>
      %17 = vector.multi_reduction <add>, %16, %cst_12 [1, 2] : vector<1x8x128xf32> to vector<1xf32>
      %18 = vector.shape_cast %17 : vector<1xf32> to vector<1x1x1xf32>
      %19 = vector.extract %18[0, 0, 0] : f32 from vector<1x1x1xf32>
      %cst_13 = arith.constant 0.001953125 : f32
      %20 = arith.mulf %19, %cst_13 : f32
      %c0_14 = arith.constant 0 : index
      %c0_15 = arith.constant 0 : index
      %21 = memref.load %arg3[%c0_14, %c0_15] : memref<1x1xf32, #tpu.memory_space<smem>>
      memref.store %20, %arg3[%c0_14, %c0_15] : memref<1x1xf32, #tpu.memory_space<smem>>
    } else {
    }
    return
  }
  func.func @transform_0(%arg0: i32) -> (i32, i32) {
    %c0_i32 = arith.constant 0 : i32
    %c0_i32_0 = arith.constant 0 : i32
    return %arg0, %c0_i32 : i32, i32
  }
  func.func @transform_1(%arg0: i32) -> (i32, i32) {
    %c0_i32 = arith.constant 0 : i32
    %c0_i32_0 = arith.constant 0 : i32
    return %arg0, %c0_i32 : i32, i32
  }
  func.func @transform_2(%arg0: i32) -> (i32, i32) {
    %c0_i32 = arith.constant 0 : i32
    %c0_i32_0 = arith.constant 0 : i32
    %c0_i32_1 = arith.constant 0 : i32
    return %c0_i32, %c0_i32_0 : i32, i32
  }
}

</mosaic_0001>

<llo_original>
// kernel: hungarian_loss_seqmat.3
$region0: #{hungarian_loss_seqmat.3}
  #allocation0 [shape = 'u32[]', space=smem, size = 0x4, offset = 0x4, fixed_abs, tag = 'smem constant byte address 0x4 - core index']
  #allocation1 [shape = 'u32[144,128]{1,0:T(1,128)}', space=vmem, size = 0x12000, scoped, tag = 'internal scratch']
  %s0 = inlined_call_operand.hbm [shape: f32[2,8,32], index: 0, kind: input, shape index: {}]
  %s1 = inlined_call_operand.hbm [shape: f32[2,8,32], index: 1, kind: input, shape index: {}]
  %s2 = inlined_call_operand.hbm [shape: f32[1,1,32], index: 2, kind: input, shape index: {}]
  %s3 = inlined_call_operand.vmem [shape: f32[2,8,8], index: 3, kind: output, shape index: {}]
  %s4 = sld [smem:[#allocation0]]
  $region57: #{hungarian_loss_seqmat.3} parent=0
    _
  %s6 = ssub.s32 1, %s4
  %s7 = scalar_select 0, %s6, %s4
  $region1: #{hungarian_loss_seqmat.3} parent=0
    #allocation2 [shape = 'u8[8192]{0}', space=vmem, size = 0x2000, scoped, tag = 'input window, operand 0']
    #allocation3 [shape = 's32[2]{0}', space=sflag, size = 0x8, scoped, tag = 'scoped memory for hungarian_loss_seqmat.3']
    #allocation4 [shape = 'u8[8192]{0}', space=vmem, size = 0x2000, scoped, tag = 'input window, operand 1']
    #allocation5 [shape = 's32[2]{0}', space=sflag, size = 0x8, scoped, tag = 'scoped memory for hungarian_loss_seqmat.3']
    #allocation6 [shape = 'u8[512]{0}', space=vmem, size = 0x400, scoped, tag = 'input window, operand 2, single buffered']
    %8 = vsyncpa [#allocation3], 0
    %s9 = scalar_lea.sflag [#allocation3], 1
    %10 = vsyncpa %s9, 0
    %11 = vsyncpa [#allocation5], 0
    %s12 = scalar_lea.sflag [#allocation5], 1
    %13 = vsyncpa %s12, 0
    loop: start=0, step=1, limit=4
    $region2: #{hungarian_loss_seqmat.3} parent=1 // loop_pre_header
      _
    $region3: #{hungarian_loss_seqmat.3} parent=1 // loop_header
      %s15 = sphi 0, %s19
      %p16 = scmp.ge.s32.totalorder %s15, 4
      %s25 = sphi 0, %s27
      %s28 = sphi 0, %s25
      %s29 = sphi 0, %s28
      %s45 = sphi 0, %s29
      %s51 = sphi 0, %s53
      %s54 = sphi 0, %s51
      %s55 = sphi 0, %s54
      %s71 = sphi 0, %s55
      %s75 = sphi 0, %s75
      %s77 = sphi 0, %s75
      %s78 = sphi 0, %s77
      %s92 = sphi 0, %s78
      %s98 = sphi 0, %s100
      %s101 = sphi 0, %s98
      %s102 = sphi 0, %s101
      %s118 = sphi 0, %s102
    $region4: #{hungarian_loss_seqmat.3} parent=1 // loop_header_branch
      %18 = sbr.rel (%p16) target = $region8
    $region5: #{hungarian_loss_seqmat.3} parent=1 // loop_body
      %s20 = ssub.s32 %s15, 1
      %s21 = ssub.s32 %s15, 2
      %s22 = sadd.s32 %s15, 1
      %s23 = ssub.s32 %s15, %s22
      %p24 = scmp.eq.s32.totalorder %s23, 0
      %s26 = sadd.s32 %s25, 1
      %s27 = scalar_select %p24, %s25, %s26
      %p30 = pneg %p24
      %p31 = scmp.eq.s32.totalorder %s15, 1
      %p32 = por %p30, %p31
      %p33 = scmp.ne.s32.totalorder %s25, %s28
      %p34 = scmp.eq.s32.totalorder %s15, 0
      %p35 = por %p33, %p34
      %p36 = scmp.ne.s32.totalorder %s25, %s28
      %p37 = scmp.eq.s32.totalorder %s20, 1
      %p38 = por %p36, %p37
      %p39 = scmp.ne.s32.totalorder %s28, %s29
      %p40 = scmp.eq.s32.totalorder %s20, 0
      %p41 = por %p39, %p40
      %p42 = scmp.ne.s32.totalorder %s28, %s29
      %p43 = scmp.eq.s32.totalorder %s21, 1
      %p44 = por %p42, %p43
      %p46 = scmp.ne.s32.totalorder %s29, %s45
      %p47 = scmp.eq.s32.totalorder %s21, 0
      %p48 = por %p46, %p47
      %s49 = ssub.s32 %s15, %s22
      %p50 = scmp.eq.s32.totalorder %s49, 0
      %s52 = sadd.s32 %s51, 1
      %s53 = scalar_select %p50, %s51, %s52
      %p56 = pneg %p50
      %p57 = scmp.eq.s32.totalorder %s15, 1
      %p58 = por %p56, %p57
      %p59 = scmp.ne.s32.totalorder %s51, %s54
      %p60 = scmp.eq.s32.totalorder %s15, 0
      %p61 = por %p59, %p60
      %p62 = scmp.ne.s32.totalorder %s51, %s54
      %p63 = scmp.eq.s32.totalorder %s20, 1
      %p64 = por %p62, %p63
      %p65 = scmp.ne.s32.totalorder %s54, %s55
      %p66 = scmp.eq.s32.totalorder %s20, 0
      %p67 = por %p65, %p66
      %p68 = scmp.ne.s32.totalorder %s54, %s55
      %p69 = scmp.eq.s32.totalorder %s21, 1
      %p70 = por %p68, %p69
      %p72 = scmp.ne.s32.totalorder %s55, %s71
      %p73 = scmp.eq.s32.totalorder %s21, 0
      %p74 = por %p72, %p73
      %s76 = sadd.s32 %s75, 1
      %p79 = scmp.eq.s32.totalorder %s15, 1
      %p80 = scmp.ne.s32.totalorder %s75, %s77
      %p81 = scmp.eq.s32.totalorder %s15, 0
      %p82 = por %p80, %p81
      %p83 = scmp.ne.s32.totalorder %s75, %s77
      %p84 = scmp.eq.s32.totalorder %s20, 1
      %p85 = por %p83, %p84
      %p86 = scmp.ne.s32.totalorder %s77, %s78
      %p87 = scmp.eq.s32.totalorder %s20, 0
      %p88 = por %p86, %p87
      %p89 = scmp.ne.s32.totalorder %s77, %s78
      %p90 = scmp.eq.s32.totalorder %s21, 1
      %p91 = por %p89, %p90
      %p93 = scmp.ne.s32.totalorder %s78, %s92
      %p94 = scmp.eq.s32.totalorder %s21, 0
      %p95 = por %p93, %p94
      %s96 = ssub.s32 %s15, %s22
      %p97 = scmp.eq.s32.totalorder %s96, 0
      %s99 = sadd.s32 %s98, 1
      %s100 = scalar_select %p97, %s98, %s99
      %p103 = pneg %p97
      %p104 = scmp.eq.s32.totalorder %s15, 1
      %p105 = por %p103, %p104
      %p106 = scmp.ne.s32.totalorder %s98, %s101
      %p107 = scmp.eq.s32.totalorder %s15, 0
      %p108 = por %p106, %p107
      %p109 = scmp.ne.s32.totalorder %s98, %s101
      %p110 = scmp.eq.s32.totalorder %s20, 1
      %p111 = por %p109, %p110
      %p112 = scmp.ne.s32.totalorder %s101, %s102
      %p113 = scmp.eq.s32.totalorder %s20, 0
      %p114 = por %p112, %p113
      %p115 = scmp.ne.s32.totalorder %s101, %s102
      %p116 = scmp.eq.s32.totalorder %s21, 1
      %p117 = por %p115, %p116
      %p119 = scmp.ne.s32.totalorder %s102, %s118
      %p120 = scmp.eq.s32.totalorder %s21, 0
      %p121 = por %p119, %p120
      %p122 = scmp.le.s32.totalorder 1, %s15
      %p123 = scmp.lt.s32.totalorder %s15, 3
      %p124 = pnand %p122, %p123
      %p125 = pneg %p124
      // Predicated region
      $region9: #{hungarian_loss_seqmat.3} parent=5 // pred_check
        _
      $region10: #{hungarian_loss_seqmat.3} parent=5 // pred_check_branch
        %127 = sbr.rel (%p124) target = $region12
      $region11: #{hungarian_loss_seqmat.3} parent=5 // pred_region
        %s128 = ssub.s32 %s15, 1
        // Predicated region
        $region13: #{hungarian_loss_seqmat.3} parent=11 // pred_check
          %p129 = pneg %p88
        $region14: #{hungarian_loss_seqmat.3} parent=11 // pred_check_branch
          %131 = sbr.rel (%p129) target = $region16
        $region15: #{hungarian_loss_seqmat.3} parent=11 // pred_region
          %s133 = ssub.s32 16, 16
          %134 = vsyncadd [#allocation5], %s133
          %s136 = sshll.u32 [#allocation6], 4
          %s137 = int_to_ptr.vmem [resolvable:$true] %s136
          %139 = dma.hbm_to_vmem [thread:$0]  %s2, 16, %s137, [#allocation5]
        $region16: #{hungarian_loss_seqmat.3} parent=11 // pred_fallthru
          _
      $region12: #{hungarian_loss_seqmat.3} parent=5 // pred_fallthru
        _
      %p140 = scmp.lt.s32.totalorder %s15, 2
      // Predicated region
      $region17: #{hungarian_loss_seqmat.3} parent=5 // pred_check
        %p141 = pneg %p140
      $region18: #{hungarian_loss_seqmat.3} parent=5 // pred_check_branch
        %143 = sbr.rel (%p141) target = $region20
      $region19: #{hungarian_loss_seqmat.3} parent=5 // pred_region
        // Predicated region
        $region21: #{hungarian_loss_seqmat.3} parent=19 // pred_check
          %p144 = pneg %p35
        $region22: #{hungarian_loss_seqmat.3} parent=19 // pred_check_branch
          %146 = sbr.rel (%p144) target = $region24
        $region23: #{hungarian_loss_seqmat.3} parent=19 // pred_region
          %s147 = sand.u32 %s25, 1
          %s148 = scalar_lea.sflag [#allocation3], %s147
          %s149 = sand.u32 %s25, 1
          %s150 = smul.addr %s149, 8
          %s151 = scalar_lea.vmem [#allocation2], %s150
          %s153 = ssub.s32 128, 128
          %154 = vsyncadd %s148, %s153
          %s155 = smul.addr %s15, 128
          %s156 = scalar_lea.hbm %s0, %s155
          %s158 = sshll.u32 %s151, 4
          %s159 = int_to_ptr.vmem [resolvable:$true] %s158
          %161 = dma.hbm_to_vmem [thread:$0]  %s156, 128, %s159, %s148
        $region24: #{hungarian_loss_seqmat.3} parent=19 // pred_fallthru
          _
        // Predicated region
        $region25: #{hungarian_loss_seqmat.3} parent=19 // pred_check
          %p162 = pneg %p61
        $region26: #{hungarian_loss_seqmat.3} parent=19 // pred_check_branch
          %164 = sbr.rel (%p162) target = $region28
        $region27: #{hungarian_loss_seqmat.3} parent=19 // pred_region
          %s165 = sand.u32 %s15, 1
          %s166 = scalar_lea.sflag [#allocation5], %s165
          %s167 = sand.u32 %s51, 1
          %s168 = smul.addr %s167, 8
          %s169 = scalar_lea.vmem [#allocation4], %s168
          %s171 = ssub.s32 128, 128
          %172 = vsyncadd %s166, %s171
          %s173 = smul.addr %s15, 128
          %s174 = scalar_lea.hbm %s1, %s173
          %s176 = sshll.u32 %s169, 4
          %s177 = int_to_ptr.vmem [resolvable:$true] %s176
          %179 = dma.hbm_to_vmem [thread:$0]  %s174, 128, %s177, %s166
        $region28: #{hungarian_loss_seqmat.3} parent=19 // pred_fallthru
          _
      $region20: #{hungarian_loss_seqmat.3} parent=5 // pred_fallthru
        _
      %p180 = scmp.le.s32.totalorder 1, %s15
      %p181 = scmp.lt.s32.totalorder %s15, 3
      %p182 = pnand %p180, %p181
      %p183 = pneg %p182
      // Predicated region
      $region29: #{hungarian_loss_seqmat.3} parent=5 // pred_check
        _
      $region30: #{hungarian_loss_seqmat.3} parent=5 // pred_check_branch
        %185 = sbr.rel (%p182) target = $region32
      $region31: #{hungarian_loss_seqmat.3} parent=5 // pred_region
        %s186 = ssub.s32 %s15, 1
        %s187 = sand.u32 %s28, 1
        %s188 = scalar_lea.sflag [#allocation3], %s187
        %s189 = sand.u32 %s28, 1
        %s190 = smul.addr %s189, 8
        %s191 = scalar_lea.vmem [#allocation2], %s190
        // Predicated region
        $region33: #{hungarian_loss_seqmat.3} parent=31 // pred_check
          %p192 = pneg %p41
        $region34: #{hungarian_loss_seqmat.3} parent=31 // pred_check_branch
          %194 = sbr.rel (%p192) target = $region36
        $region35: #{hungarian_loss_seqmat.3} parent=31 // pred_region
          %195 = dma.done %s188, 128
        $region36: #{hungarian_loss_seqmat.3} parent=31 // pred_fallthru
          _
        %s196 = sand.u32 %s20, 1
        %s197 = scalar_lea.sflag [#allocation5], %s196
        %s198 = sand.u32 %s54, 1
        %s199 = smul.addr %s198, 8
        %s200 = scalar_lea.vmem [#allocation4], %s199
        // Predicated region
        $region37: #{hungarian_loss_seqmat.3} parent=31 // pred_check
          %p201 = pneg %p67
        $region38: #{hungarian_loss_seqmat.3} parent=31 // pred_check_branch
          %203 = sbr.rel (%p201) target = $region40
        $region39: #{hungarian_loss_seqmat.3} parent=31 // pred_region
          %204 = dma.done %s197, 128
        $region40: #{hungarian_loss_seqmat.3} parent=31 // pred_fallthru
          _
        // Predicated region
        $region41: #{hungarian_loss_seqmat.3} parent=31 // pred_check
          %p205 = pneg %p88
        $region42: #{hungarian_loss_seqmat.3} parent=31 // pred_check_branch
          %207 = sbr.rel (%p205) target = $region44
        $region43: #{hungarian_loss_seqmat.3} parent=31 // pred_region
          %208 = dma.done [#allocation5], 16
        $region44: #{hungarian_loss_seqmat.3} parent=31 // pred_fallthru
          _
        %s209 = sand.u32 %s28, 1
        %s210 = scalar_lea.sflag [#allocation3], %s209
        %s211 = sand.u32 %s28, 1
        %s212 = smul.addr %s211, 8
        %s213 = scalar_lea.vmem [#allocation2], %s212
        %p214 = pneg %p41
        %p215 = pneg %p38
        %s216 = sand.u32 %s20, 1
        %s217 = scalar_lea.sflag [#allocation5], %s216
        %s218 = sand.u32 %s54, 1
        %s219 = smul.addr %s218, 8
        %s220 = scalar_lea.vmem [#allocation4], %s219
        %p221 = pneg %p67
        %p222 = pneg %p64
        %p223 = pneg %p88
        %p224 = pneg %p85
        %p225 = pneg %p114
        %p226 = pneg %p111
        %p227 = scmp.lt.s32.totalorder %s20, 1
        %s228 = scalar_select %p227, %s20, 1
        %s229 = smul.addr %s228, 8
        %s230 = scalar_lea.vmem %s3, %s229
        %p231 = scmp.lt.s32.totalorder %s20, 1
        %s232 = scalar_select %p231, %s20, 1
        %s233 = smul.addr %s232, 8
        %s234 = scalar_lea.vmem %s3, %s233
        %v235 = vld [vmem:[%s191] sm:$0xff]
        %v236 = vld [vmem:[#allocation6] sm:$0x1]
        %v238 = vlaneseq
        %v239 = vshrl.u32 %v238, 7
        %v240 = vsub.s32 0, %v239
        %v241 = vrot.slane %v236, %v240
        %v243 = vmul.f32 %v235, %v241
        %v244 = vld [vmem:[%s200] sm:$0xff]
        %v245 = vmul.f32 %v244, %v241
        %v247 = vcombine.high %v243, %v243
        %v249 = vunpack.c.l.s4 1966171168
        %v250 = vunpack.c.0.s8 %v249
        %v251 = vlaneseq
        %v252 = vshrl.u32 %v251, 7
        %v253 = vsub.s32 %v250, %v252
        %v254 = vrot.slane %v243, %v253
        %v256 = vunpack.c.l.s4 1966171168
        %v257 = vunpack.c.0.s8 %v256
        %v258 = vlaneseq
        %v259 = vshrl.u32 %v258, 7
        %v260 = vsub.s32 %v257, %v259
        %v261 = vrot.slane %v247, %v260
        %v262 = vcombine.high %v254, %v254
        %v263 = vcombine.high %v261, %v261
        %v265 = vunpack.c.l.s4 1966171168
        %v266 = vunpack.c.0.s8 %v265
        %v267 = vlaneseq
        %v268 = vshrl.u32 %v267, 7
        %v269 = vsub.s32 %v266, %v268
        %v270 = vrot.slane %v254, %v269
        %v272 = vunpack.c.l.s4 1966171168
        %v273 = vunpack.c.0.s8 %v272
        %v274 = vlaneseq
        %v275 = vshrl.u32 %v274, 7
        %v276 = vsub.s32 %v273, %v275
        %v277 = vrot.slane %v261, %v276
        %v279 = vunpack.c.l.s4 1966171168
        %v280 = vunpack.c.0.s8 %v279
        %v281 = vlaneseq
        %v282 = vshrl.u32 %v281, 7
        %v283 = vsub.s32 %v280, %v282
        %v284 = vrot.slane %v262, %v283
        %v286 = vunpack.c.l.s4 1966171168
        %v287 = vunpack.c.0.s8 %v286
        %v288 = vlaneseq
        %v289 = vshrl.u32 %v288, 7
        %v290 = vsub.s32 %v287, %v289
        %v291 = vrot.slane %v263, %v290
        %v292 = vcombine.high %v270, %v270
        %v293 = vcombine.high %v277, %v277
        %v294 = vcombine.high %v284, %v284
        %v295 = vcombine.high %v291, %v291
        %v296 = vlaneseq
        %v297 = vshrl.u32 %v296, 7
        %v298 = vsub.s32 0, %v297
        %v299 = vrot.slane %v270, %v298
        %v300 = vlaneseq
        %v301 = vshrl.u32 %v300, 7
        %v302 = vsub.s32 0, %v301
        %v303 = vrot.slane %v284, %v302
        %v304 = vlaneseq
        %v305 = vshrl.u32 %v304, 7
        %v306 = vsub.s32 0, %v305
        %v307 = vrot.slane %v292, %v306
        %v308 = vlaneseq
        %v309 = vshrl.u32 %v308, 7
        %v310 = vsub.s32 0, %v309
        %v311 = vrot.slane %v294, %v310
        %v312 = vlaneseq
        %v313 = vshrl.u32 %v312, 7
        %v314 = vsub.s32 0, %v313
        %v315 = vrot.slane %v277, %v314
        %v316 = vlaneseq
        %v317 = vshrl.u32 %v316, 7
        %v318 = vsub.s32 0, %v317
        %v319 = vrot.slane %v291, %v318
        %v320 = vlaneseq
        %v321 = vshrl.u32 %v320, 7
        %v322 = vsub.s32 0, %v321
        %v323 = vrot.slane %v293, %v322
        %v324 = vlaneseq
        %v325 = vshrl.u32 %v324, 7
        %v326 = vsub.s32 0, %v325
        %v327 = vrot.slane %v295, %v326
        %v336 = vsub.f32 %v299, %v245
        %v337 = vsub.f32 %v303, %v245
        %v338 = vsub.f32 %v307, %v245
        %v339 = vsub.f32 %v311, %v245
        %v340 = vsub.f32 %v315, %v245
        %v341 = vsub.f32 %v319, %v245
        %v342 = vsub.f32 %v323, %v245
        %v343 = vsub.f32 %v327, %v245
        %v344 = vmul.f32 %v336, %v336
        %v345 = vmul.f32 %v337, %v337
        %v346 = vmul.f32 %v338, %v338
        %v347 = vmul.f32 %v339, %v339
        %v348 = vmul.f32 %v340, %v340
        %v349 = vmul.f32 %v341, %v341
        %v350 = vmul.f32 %v342, %v342
        %v351 = vmul.f32 %v343, %v343
        %vm352 = vcmask 261120
        %v353 = vsel %vm352, %v344, 0.0
        %354 = vadd.xlane.f32.xlu0 %v353
        %v355 = vpop.xlane.xlu0 %354
        %v356 = vsel %vm352, %v345, 0.0
        %357 = vadd.xlane.f32.xlu0 %v356
        %v358 = vpop.xlane.xlu0 %357
        %v359 = vsel %vm352, %v346, 0.0
        %360 = vadd.xlane.f32.xlu0 %v359
        %v361 = vpop.xlane.xlu0 %360
        %v362 = vsel %vm352, %v347, 0.0
        %363 = vadd.xlane.f32.xlu0 %v362
        %v364 = vpop.xlane.xlu0 %363
        %v365 = vsel %vm352, %v348, 0.0
        %366 = vadd.xlane.f32.xlu0 %v365
        %v367 = vpop.xlane.xlu0 %366
        %v368 = vsel %vm352, %v349, 0.0
        %369 = vadd.xlane.f32.xlu0 %v368
        %v370 = vpop.xlane.xlu0 %369
        %v371 = vsel %vm352, %v350, 0.0
        %372 = vadd.xlane.f32.xlu0 %v371
        %v373 = vpop.xlane.xlu0 %372
        %v374 = vsel %vm352, %v351, 0.0
        %375 = vadd.xlane.f32.xlu0 %v374
        %v376 = vpop.xlane.xlu0 %375
        %v377 = vrsqrt.pop %v355
        %v378 = vmul.f32 %v355, %v377
        %vm379 = vcmp.eq.f32.partialorder %v355, inf
        %v380 = vsel %vm379, %v355, %v378
        %vm381 = vcmp.eq.f32.partialorder %v355, 0.0
        %v382 = vand.u32 %v355, 2147483648
        %v383 = vsel %vm381, %v382, %v380
        %v384 = vrsqrt.pop %v358
        %v385 = vmul.f32 %v358, %v384
        %vm386 = vcmp.eq.f32.partialorder %v358, inf
        %v387 = vsel %vm386, %v358, %v385
        %vm388 = vcmp.eq.f32.partialorder %v358, 0.0
        %v389 = vand.u32 %v358, 2147483648
        %v390 = vsel %vm388, %v389, %v387
        %v391 = vrsqrt.pop %v361
        %v392 = vmul.f32 %v361, %v391
        %vm393 = vcmp.eq.f32.partialorder %v361, inf
        %v394 = vsel %vm393, %v361, %v392
        %vm395 = vcmp.eq.f32.partialorder %v361, 0.0
        %v396 = vand.u32 %v361, 2147483648
        %v397 = vsel %vm395, %v396, %v394
        %v398 = vrsqrt.pop %v364
        %v399 = vmul.f32 %v364, %v398
        %vm400 = vcmp.eq.f32.partialorder %v364, inf
        %v401 = vsel %vm400, %v364, %v399
        %vm402 = vcmp.eq.f32.partialorder %v364, 0.0
        %v403 = vand.u32 %v364, 2147483648
        %v404 = vsel %vm402, %v403, %v401
        %v405 = vrsqrt.pop %v367
        %v406 = vmul.f32 %v367, %v405
        %vm407 = vcmp.eq.f32.partialorder %v367, inf
        %v408 = vsel %vm407, %v367, %v406
        %vm409 = vcmp.eq.f32.partialorder %v367, 0.0
        %v410 = vand.u32 %v367, 2147483648
        %v411 = vsel %vm409, %v410, %v408
        %v412 = vrsqrt.pop %v370
        %v413 = vmul.f32 %v370, %v412
        %vm414 = vcmp.eq.f32.partialorder %v370, inf
        %v415 = vsel %vm414, %v370, %v413
        %vm416 = vcmp.eq.f32.partialorder %v370, 0.0
        %v417 = vand.u32 %v370, 2147483648
        %v418 = vsel %vm416, %v417, %v415
        %v419 = vrsqrt.pop %v373
        %v420 = vmul.f32 %v373, %v419
        %vm421 = vcmp.eq.f32.partialorder %v373, inf
        %v422 = vsel %vm421, %v373, %v420
        %vm423 = vcmp.eq.f32.partialorder %v373, 0.0
        %v424 = vand.u32 %v373, 2147483648
        %v425 = vsel %vm423, %v424, %v422
        %v426 = vrsqrt.pop %v376
        %v427 = vmul.f32 %v376, %v426
        %vm428 = vcmp.eq.f32.partialorder %v376, inf
        %v429 = vsel %vm428, %v376, %v427
        %vm430 = vcmp.eq.f32.partialorder %v376, 0.0
        %v431 = vand.u32 %v376, 2147483648
        %v432 = vsel %vm430, %v431, %v429
        %v441 = vlaneseq
        %v442 = vand.u32 %v441, 127
        %v443 = vlaneseq
        %v444 = vshrl.u32 %v443, 7
        %v445 = vsub.s32 %v442, %v444
        %v446 = vrot.slane %v383, %v445
        %v447 = vlaneseq
        %v448 = vshrl.u32 %v447, 7
        %v449 = vsub.s32 %v442, %v448
        %v450 = vrot.slane %v390, %v449
        %v451 = vlaneseq
        %v452 = vshrl.u32 %v451, 7
        %v453 = vsub.s32 %v442, %v452
        %v454 = vrot.slane %v397, %v453
        %v455 = vlaneseq
        %v456 = vshrl.u32 %v455, 7
        %v457 = vsub.s32 %v442, %v456
        %v458 = vrot.slane %v404, %v457
        %v459 = vlaneseq
        %v460 = vshrl.u32 %v459, 7
        %v461 = vsub.s32 %v442, %v460
        %v462 = vrot.slane %v411, %v461
        %v463 = vlaneseq
        %v464 = vshrl.u32 %v463, 7
        %v465 = vsub.s32 %v442, %v464
        %v466 = vrot.slane %v418, %v465
        %v467 = vlaneseq
        %v468 = vshrl.u32 %v467, 7
        %v469 = vsub.s32 %v442, %v468
        %v470 = vrot.slane %v425, %v469
        %v471 = vlaneseq
        %v472 = vshrl.u32 %v471, 7
        %v473 = vsub.s32 %v442, %v472
        %v474 = vrot.slane %v432, %v473
        %vm475 = vcmask 1041409
        %v476 = vsel %vm475, %v450, %v446
        %vm477 = vcmask 1042434
        %v478 = vsel %vm477, %v454, %v476
        %vm479 = vcmask 1043459
        %v480 = vsel %vm479, %v458, %v478
        %vm481 = vcmask 1044484
        %v482 = vsel %vm481, %v462, %v480
        %vm483 = vcmask 1045509
        %v484 = vsel %vm483, %v466, %v482
        %vm485 = vcmask 1046534
        %v486 = vsel %vm485, %v470, %v484
        %vm487 = vcmask 1047559
        %v488 = vsel %vm487, %v474, %v486
        %vm490 = vcmask 64512
        %491 = vst.msk [vmem:[%s234] sm:$0xff] %vm490, %v488
        %p492 = scmp.lt.s32.totalorder %s20, 1
        %s493 = scalar_select %p492, %s20, 1
        %s494 = smul.addr %s493, 8
        %s495 = scalar_lea.vmem %s3, %s494
        // Predicated region
        $region45: #{hungarian_loss_seqmat.3} parent=31 // pred_check
          %p496 = pneg %p111
        $region46: #{hungarian_loss_seqmat.3} parent=31 // pred_check_branch
          %498 = sbr.rel (%p496) target = $region48
        $region47: #{hungarian_loss_seqmat.3} parent=31 // pred_region
          _
        $region48: #{hungarian_loss_seqmat.3} parent=31 // pred_fallthru
          _
      $region32: #{hungarian_loss_seqmat.3} parent=5 // pred_fallthru
        _
      %p499 = scmp.le.s32.totalorder 2, %s15
      // Predicated region
      $region49: #{hungarian_loss_seqmat.3} parent=5 // pred_check
        %p500 = pneg %p499
      $region50: #{hungarian_loss_seqmat.3} parent=5 // pred_check_branch
        %502 = sbr.rel (%p500) target = $region52
      $region51: #{hungarian_loss_seqmat.3} parent=5 // pred_region
        %s503 = ssub.s32 %s15, 2
        // Predicated region
        $region53: #{hungarian_loss_seqmat.3} parent=51 // pred_check
          %p504 = pneg %p117
        $region54: #{hungarian_loss_seqmat.3} parent=51 // pred_check_branch
          %506 = sbr.rel (%p504) target = $region56
        $region55: #{hungarian_loss_seqmat.3} parent=51 // pred_region
          %p507 = scmp.lt.s32.totalorder %s21, 1
          %s508 = scalar_select %p507, %s21, 1
          %s509 = smul.addr %s508, 8
          %s510 = scalar_lea.vmem %s3, %s509
        $region56: #{hungarian_loss_seqmat.3} parent=51 // pred_fallthru
          _
      $region52: #{hungarian_loss_seqmat.3} parent=5 // pred_fallthru
        _
    $region6: #{hungarian_loss_seqmat.3} parent=1 // loop_footer
      %s19 = sadd.s32 1, %s15
    $region7: #{hungarian_loss_seqmat.3} parent=1 // loop_footer_branch
      %14 = sbr.rel target = $region3
    $region8: #{hungarian_loss_seqmat.3} parent=1 // loop_exit
      _
    %511 = vsyncpa [#allocation3], 1
    %s512 = scalar_lea.sflag [#allocation3], 1
    %513 = vsyncpa %s512, 1
    %514 = vsyncpa [#allocation5], 1
    %s515 = scalar_lea.sflag [#allocation5], 1
    %516 = vsyncpa %s515, 1

// kernel: hungarian_loss_seqmat.5
$region0: #{hungarian_loss_seqmat.5}
  #allocation0 [shape = 'u32[]', space=smem, size = 0x4, offset = 0x4, fixed_abs, tag = 'smem constant byte address 0x4 - core index']
  #allocation1 [shape = 'u32[144,128]{1,0:T(1,128)}', space=vmem, size = 0x12000, scoped, tag = 'internal scratch']
  #allocation2 [shape = 'f32[8,128]{1,0:T(8,128)}', space=vmem, size = 0x1000, scoped, tag = 'scratch operand']
  %s0 = inlined_call_operand.vmem [shape: f32[8,128], index: 0, kind: input, shape index: {}]
  %s1 = inlined_call_operand.vmem [shape: f32[8,128], index: 1, kind: input, shape index: {}]
  %s2 = inlined_call_operand.hbm [shape: f32[1,1], index: 2, kind: output, shape index: {}]
  %s3 = sld [smem:[#allocation0]]
  $region26: #{hungarian_loss_seqmat.5} parent=0
    _
  %s5 = ssub.s32 1, %s3
  %s6 = scalar_select 0, %s5, %s3
  $region1: #{hungarian_loss_seqmat.5} parent=0
    #allocation3 [shape = 'u8[512]{0}', space=smem, size = 0x200, scoped, tag = 'output window, operand 0, single buffered']
    #allocation4 [shape = 's32[1]{0}', space=sflag, size = 0x4, scoped, tag = 'scoped memory for hungarian_loss_seqmat.5']
    %7 = vsyncpa [#allocation4], 0
    // Predicated region
    $region2: #{hungarian_loss_seqmat.5} parent=1 // pred_check
      _
    $region3: #{hungarian_loss_seqmat.5} parent=1 // pred_check_branch
      %9 = sbr.rel (0) target = $region5
    $region4: #{hungarian_loss_seqmat.5} parent=1 // pred_region
      _
    $region5: #{hungarian_loss_seqmat.5} parent=1 // pred_fallthru
      _
    // Predicated region
    $region6: #{hungarian_loss_seqmat.5} parent=1 // pred_check
      _
    $region7: #{hungarian_loss_seqmat.5} parent=1 // pred_check_branch
      %11 = sbr.rel (0) target = $region9
    $region8: #{hungarian_loss_seqmat.5} parent=1 // pred_region
      _
    $region9: #{hungarian_loss_seqmat.5} parent=1 // pred_fallthru
      _
    %p12 = scmp.eq.s32.totalorder 0, 0
    // Predicated region
    $region10: #{hungarian_loss_seqmat.5} parent=1 // pred_check
      %p13 = pneg %p12
    $region11: #{hungarian_loss_seqmat.5} parent=1 // pred_check_branch
      %15 = sbr.rel (%p13) target = $region13
    $region12: #{hungarian_loss_seqmat.5} parent=1 // pred_region
      %16 = vst [vmem:[#allocation2] sm:$0xff] 0.0
    $region13: #{hungarian_loss_seqmat.5} parent=1 // pred_fallthru
      _
    %v17 = vld [vmem:[%s0] sm:$0xff]
    %v18 = vld [vmem:[%s1] sm:$0xff]
    %v19 = vsub.f32 %v17, %v18
    %v20 = vmul.f32 %v19, %v19
    %v21 = vld [vmem:[#allocation2] sm:$0xff]
    %v22 = vadd.f32 %v20, 0.0
    %v23 = vadd.f32 %v21, %v22
    %24 = vst [vmem:[#allocation2] sm:$0xff] %v23
    // Predicated region
    $region14: #{hungarian_loss_seqmat.5} parent=1 // pred_check
      %p25 = pneg %p12
    $region15: #{hungarian_loss_seqmat.5} parent=1 // pred_check_branch
      %27 = sbr.rel (%p25) target = $region17
    $region16: #{hungarian_loss_seqmat.5} parent=1 // pred_region
      %v28 = vld [vmem:[#allocation2] sm:$0xff]
      %29 = vadd.xlane.f32.xlu0 %v28
      %v30 = vpop.xlane.xlu0 %29
      %v31 = vrot.slane %v30, 4
      %v32 = vadd.f32 %v30, %v31
      %v33 = vrot.slane %v32, 2
      %v34 = vadd.f32 %v32, %v33
      %v35 = vrot.slane %v34, 1
      %v36 = vadd.f32 %v34, %v35
      %s37 = vtos %v36
      %s38 = smul.f32 %s37, 0.0078125
      %s39 = scalar_lea.smem [#allocation3], 0
      %40 = sst [smem:[%s39]] %s38
    $region17: #{hungarian_loss_seqmat.5} parent=1 // pred_fallthru
      _
    // Predicated region
    $region18: #{hungarian_loss_seqmat.5} parent=1 // pred_check
      _
    $region19: #{hungarian_loss_seqmat.5} parent=1 // pred_check_branch
      %42 = sbr.rel (0) target = $region21
    $region20: #{hungarian_loss_seqmat.5} parent=1 // pred_region
      %s44 = ssub.s32 16, 16
      %45 = vsyncadd [#allocation4], %s44
      %48 = dma.smem_to_hbm [#allocation3], 16, %s2, [#allocation4]
    $region21: #{hungarian_loss_seqmat.5} parent=1 // pred_fallthru
      _
    // Predicated region
    $region22: #{hungarian_loss_seqmat.5} parent=1 // pred_check
      _
    $region23: #{hungarian_loss_seqmat.5} parent=1 // pred_check_branch
      %50 = sbr.rel (0) target = $region25
    $region24: #{hungarian_loss_seqmat.5} parent=1 // pred_region
      %51 = dma.done [#allocation4], 16
    $region25: #{hungarian_loss_seqmat.5} parent=1 // pred_fallthru
      _
    %52 = sfence
    %53 = vsyncpa [#allocation4], 1

// kernel: hungarian_loss_seqmat.4
$region0: #{hungarian_loss_seqmat.4}
  #allocation0 [shape = 'u32[]', space=smem, size = 0x4, offset = 0x4, fixed_abs, tag = 'smem constant byte address 0x4 - core index']
  #allocation1 [shape = 'u32[144,128]{1,0:T(1,128)}', space=vmem, size = 0x12000, scoped, tag = 'internal scratch']
  #allocation2 [shape = 'f32[8,128]{1,0:T(8,128)}', space=vmem, size = 0x1000, scoped, tag = 'scratch operand']
  %s0 = inlined_call_operand.vmem [shape: f32[8,128], index: 0, kind: input, shape index: {}]
  %s1 = inlined_call_operand.vmem [shape: f32[8,128], index: 1, kind: input, shape index: {}]
  %s2 = inlined_call_operand.hbm [shape: f32[1,1], index: 2, kind: output, shape index: {}]
  %s3 = sld [smem:[#allocation0]]
  $region26: #{hungarian_loss_seqmat.4} parent=0
    _
  %s5 = ssub.s32 1, %s3
  %s6 = scalar_select 0, %s5, %s3
  $region1: #{hungarian_loss_seqmat.4} parent=0
    #allocation3 [shape = 'u8[512]{0}', space=smem, size = 0x200, scoped, tag = 'output window, operand 0, single buffered']
    #allocation4 [shape = 's32[1]{0}', space=sflag, size = 0x4, scoped, tag = 'scoped memory for hungarian_loss_seqmat.4']
    %7 = vsyncpa [#allocation4], 0
    // Predicated region
    $region2: #{hungarian_loss_seqmat.4} parent=1 // pred_check
      _
    $region3: #{hungarian_loss_seqmat.4} parent=1 // pred_check_branch
      %9 = sbr.rel (0) target = $region5
    $region4: #{hungarian_loss_seqmat.4} parent=1 // pred_region
      _
    $region5: #{hungarian_loss_seqmat.4} parent=1 // pred_fallthru
      _
    // Predicated region
    $region6: #{hungarian_loss_seqmat.4} parent=1 // pred_check
      _
    $region7: #{hungarian_loss_seqmat.4} parent=1 // pred_check_branch
      %11 = sbr.rel (0) target = $region9
    $region8: #{hungarian_loss_seqmat.4} parent=1 // pred_region
      _
    $region9: #{hungarian_loss_seqmat.4} parent=1 // pred_fallthru
      _
    %p12 = scmp.eq.s32.totalorder 0, 0
    // Predicated region
    $region10: #{hungarian_loss_seqmat.4} parent=1 // pred_check
      %p13 = pneg %p12
    $region11: #{hungarian_loss_seqmat.4} parent=1 // pred_check_branch
      %15 = sbr.rel (%p13) target = $region13
    $region12: #{hungarian_loss_seqmat.4} parent=1 // pred_region
      %16 = vst [vmem:[#allocation2] sm:$0xff] 0.0
    $region13: #{hungarian_loss_seqmat.4} parent=1 // pred_fallthru
      _
    %v17 = vld [vmem:[%s0] sm:$0xff]
    %v18 = vld [vmem:[%s1] sm:$0xff]
    %v19 = vsub.f32 %v17, %v18
    %v20 = vmul.f32 %v19, %v19
    %v21 = vld [vmem:[#allocation2] sm:$0xff]
    %v22 = vadd.f32 %v20, 0.0
    %v23 = vadd.f32 %v21, %v22
    %24 = vst [vmem:[#allocation2] sm:$0xff] %v23
    // Predicated region
    $region14: #{hungarian_loss_seqmat.4} parent=1 // pred_check
      %p25 = pneg %p12
    $region15: #{hungarian_loss_seqmat.4} parent=1 // pred_check_branch
      %27 = sbr.rel (%p25) target = $region17
    $region16: #{hungarian_loss_seqmat.4} parent=1 // pred_region
      %v28 = vld [vmem:[#allocation2] sm:$0xff]
      %29 = vadd.xlane.f32.xlu0 %v28
      %v30 = vpop.xlane.xlu0 %29
      %v31 = vrot.slane %v30, 4
      %v32 = vadd.f32 %v30, %v31
      %v33 = vrot.slane %v32, 2
      %v34 = vadd.f32 %v32, %v33
      %v35 = vrot.slane %v34, 1
      %v36 = vadd.f32 %v34, %v35
      %s37 = vtos %v36
      %s38 = smul.f32 %s37, 0.001953125
      %s39 = scalar_lea.smem [#allocation3], 0
      %40 = sst [smem:[%s39]] %s38
    $region17: #{hungarian_loss_seqmat.4} parent=1 // pred_fallthru
      _
    // Predicated region
    $region18: #{hungarian_loss_seqmat.4} parent=1 // pred_check
      _
    $region19: #{hungarian_loss_seqmat.4} parent=1 // pred_check_branch
      %42 = sbr.rel (0) target = $region21
    $region20: #{hungarian_loss_seqmat.4} parent=1 // pred_region
      %s44 = ssub.s32 16, 16
      %45 = vsyncadd [#allocation4], %s44
      %48 = dma.smem_to_hbm [#allocation3], 16, %s2, [#allocation4]
    $region21: #{hungarian_loss_seqmat.4} parent=1 // pred_fallthru
      _
    // Predicated region
    $region22: #{hungarian_loss_seqmat.4} parent=1 // pred_check
      _
    $region23: #{hungarian_loss_seqmat.4} parent=1 // pred_check_branch
      %50 = sbr.rel (0) target = $region25
    $region24: #{hungarian_loss_seqmat.4} parent=1 // pred_region
      %51 = dma.done [#allocation4], 16
    $region25: #{hungarian_loss_seqmat.4} parent=1 // pred_fallthru
      _
    %52 = sfence
    %53 = vsyncpa [#allocation4], 1

</llo_original>
